<compile_context>
chip_gen: v6e
topology: v6e:2x2x1
jax: 0.10.0
libtpu: 0.0.40
codegen_flags: <defaults>
</compile_context>

<pallas_src>
import functools

import jax
import jax.numpy as jnp
from jax.experimental import pallas as pl
from jax.experimental.pallas import tpu as pltpu

_LANES = 128


def _round_up(x, m):
    return ((x + m - 1) // m) * m


def _giou_loss_kernel(boxes_ref, out_ref, acc_ref, *, v0, v1):
    # boxes_ref block: (12, Tm, 128) coordinate-major slabs.
    #   rows 0-3  = loc_p (dx, dy, dw, dh)
    #   rows 4-7  = loc_t (x1, y1, x2, y2)
    #   rows 8-11 = prior (cx, cy, w, h)
    i = pl.program_id(1)

    @pl.when(i == 0)
    def _init():
        acc_ref[...] = jnp.zeros_like(acc_ref)

    f32 = jnp.float32

    # ---- x-axis pass (load each slab right before use: lower vreg pressure) --
    dx = boxes_ref[0].astype(f32)
    pcx = boxes_ref[8].astype(f32)
    pw = boxes_ref[10].astype(f32)
    cx = pcx + dx * v0 * pw
    dw = boxes_ref[2].astype(f32)
    w = pw * jnp.exp(dw * v1)
    px1 = cx - 0.5 * w
    px2 = px1 + w
    tx1 = boxes_ref[4].astype(f32)
    tx2 = boxes_ref[6].astype(f32)
    tw = tx2 - tx1
    inter_w = jnp.maximum(jnp.minimum(px2, tx2) - jnp.maximum(px1, tx1), 0.0)
    outer_w = jnp.maximum(jnp.maximum(px2, tx2) - jnp.minimum(px1, tx1), 0.0)

    # ---- y-axis pass ----------------------------------------------------------
    dy = boxes_ref[1].astype(f32)
    pcy = boxes_ref[9].astype(f32)
    ph = boxes_ref[11].astype(f32)
    cy = pcy + dy * v0 * ph
    dh = boxes_ref[3].astype(f32)
    h = ph * jnp.exp(dh * v1)
    py1 = cy - 0.5 * h
    py2 = py1 + h
    ty1 = boxes_ref[5].astype(f32)
    ty2 = boxes_ref[7].astype(f32)
    th = ty2 - ty1
    inter_h = jnp.maximum(jnp.minimum(py2, ty2) - jnp.maximum(py1, ty1), 0.0)
    outer_h = jnp.maximum(jnp.maximum(py2, ty2) - jnp.minimum(py1, ty1), 0.0)

    # ---- combine: paired GIoU -------------------------------------------------
    area_p = w * h
    area_t = tw * th
    inter = inter_w * inter_h
    closure = outer_w * outer_h
    union = area_p + area_t - inter
    # inter/union - (closure - union)/closure
    #   == inter/union + union/closure - 1
    #   == (inter*closure + union*union) * recip(union*closure) - 1
    giou = ((inter * closure + union * union)
            * pl.reciprocal(union * closure, approx=False) - 1.0)
    giou = jnp.clip(giou, -1.0, 1.0)

    # Padded lanes are "perfect" boxes (giou == 1 exactly) -> contribute 0.
    # Sublane-only reduce per step; cross-lane reduce happens once, outside.
    acc_ref[...] += jnp.sum(1.0 - giou, axis=0, keepdims=True)

    @pl.when(i == pl.num_programs(1) - 1)
    def _finalize():
        out_ref[...] = (5.0 * acc_ref[...]).reshape(1, 1, _LANES)


def _pad_rows(x, pad_row, n_pad):
    """Pad [N, 4] boxes to [n_pad, 4] with the given pad row."""
    x = jnp.asarray(x, jnp.float32)
    n = x.shape[0]
    if n_pad > n:
        pad = jnp.broadcast_to(jnp.asarray(pad_row, jnp.float32), (n_pad - n, 4))
        x = jnp.concatenate([x, pad], axis=0)
    return x


def giou_loss(loc_p, loc_t, prior_data, variances=(0.1, 0.2),
              block_rows=1024, num_cores=2, vmem_limit_bytes=None):
    """loc_p, loc_t, prior_data: [num_priors, 4] arrays. Returns scalar f32 loss.

    block_rows: sublane rows per tile (128 boxes per row).  1024 -> 6 MiB/block
      (12 MiB double-buffered), safe on v5e/v6e/v7x defaults.  2048 is fine on
      v6e/v7x; on v5e also pass vmem_limit_bytes.
    num_cores: leading "parallel" grid axis (2 uses both v7x TensorCores;
      harmless serialization on v5e/v6e).
    """
    n = loc_p.shape[0]
    m = -(-n // _LANES)                              # rows of 128 boxes
    m8 = _round_up(max(m, 1), 8)                     # sublane-align row count
    # Tile rows: at most the per-core share, at least 8.
    tm = min(_round_up(block_rows, 8), _round_up(-(-m8 // num_cores), 8))
    blocks_per_core = -(-m8 // (num_cores * tm))
    m_pad = num_cores * blocks_per_core * tm
    n_pad = m_pad * _LANES

    # Padding rows decode/compare to the identical unit box -> giou == 1 exactly.
    stacked = jnp.concatenate(
        [
            _pad_rows(loc_p, (0.0, 0.0, 0.0, 0.0), n_pad),
            _pad_rows(loc_t, (0.0, 0.0, 1.0, 1.0), n_pad),
            _pad_rows(prior_data, (0.5, 0.5, 1.0, 1.0), n_pad),
        ],
        axis=1,
    )                                                # (n_pad, 12)
    boxes = stacked.T.reshape(12, m_pad, _LANES)     # one pad + transpose in XLA

    kernel = functools.partial(
        _giou_loss_kernel, v0=float(variances[0]), v1=float(variances[1])
    )

    in_spec = pl.BlockSpec(
        (12, tm, _LANES), lambda c, i: (0, c * blocks_per_core + i, 0)
    )
    out_spec = pl.BlockSpec((1, 1, _LANES), lambda c, i: (c, 0, 0))

    partials = pl.pallas_call(
        kernel,
        out_shape=jax.ShapeDtypeStruct((num_cores, 1, _LANES), jnp.float32),
        grid=(num_cores, blocks_per_core),
        in_specs=[in_spec],
        out_specs=out_spec,
        scratch_shapes=[pltpu.VMEM((1, _LANES), jnp.float32)],
        compiler_params=pltpu.CompilerParams(
            dimension_semantics=("parallel", "arbitrary"),
            vmem_limit_bytes=vmem_limit_bytes,
        ),
    )(boxes)
    # Single cross-lane / cross-core reduce (tiny: num_cores*128 elements).
    return jnp.sum(partials)


def _giou_loss_ref(loc_p, loc_t, prior_data, variances=(0.1, 0.2)):
    """Pure-JAX reference mirroring the PyTorch module."""
    v0, v1 = variances
    cxcy = prior_data[:, :2] + loc_p[:, :2] * v0 * prior_data[:, 2:]
    wh = prior_data[:, 2:] * jnp.exp(loc_p[:, 2:] * v1)
    mins = cxcy - wh / 2.0
    maxs = mins + wh
    p = jnp.concatenate([mins, maxs], axis=1)
    t = loc_t

    area_p = (p[:, 2] - p[:, 0]) * (p[:, 3] - p[:, 1])
    area_t = (t[:, 2] - t[:, 0]) * (t[:, 3] - t[:, 1])
    inter = jnp.clip(jnp.minimum(p[:, 2:], t[:, 2:]) - jnp.maximum(p[:, :2], t[:, :2]), 0.0)
    outer = jnp.clip(jnp.maximum(p[:, 2:], t[:, 2:]) - jnp.minimum(p[:, :2], t[:, :2]), 0.0)
    inter_a = inter[:, 0] * inter[:, 1]
    outer_a = outer[:, 0] * outer[:, 1]
    union = area_p + area_t - inter_a
    giou = jnp.clip(inter_a / union - (outer_a - union) / outer_a, -1.0, 1.0)
    return 5.0 * jnp.sum(1.0 - giou)


if __name__ == "__main__":
    key = jax.random.PRNGKey(0)
    key_a, key_b, key_c = jax.random.split(key, 3)

    def make_inputs(k, n):
        k1, k2, k3, k4, k5 = jax.random.split(k, 5)
        loc_p = 0.1 * jax.random.normal(k1, (n, 4), dtype=jnp.float32)
        pri_c = jax.random.uniform(k2, (n, 2), minval=0.2, maxval=0.8)
        pri_wh = jax.random.uniform(k3, (n, 2), minval=0.05, maxval=0.3)
        prior_data = jnp.concatenate([pri_c, pri_wh], axis=1).astype(jnp.float32)
        t_min = jax.random.uniform(k4, (n, 2), minval=0.1, maxval=0.6)
        t_wh = jax.random.uniform(k5, (n, 2), minval=0.05, maxval=0.3)
        loc_t = jnp.concatenate([t_min, t_min + t_wh], axis=1).astype(jnp.float32)
        return loc_p, loc_t, prior_data

    # Small case (single block per core).
    lp, lt, pr = make_inputs(key_a, 8)
    loss = giou_loss(lp, lt, pr)
    jax.block_until_ready(loss)
    ref = _giou_loss_ref(lp, lt, pr)
    assert jnp.allclose(loss, ref, rtol=1e-5, atol=1e-5), (loss, ref)

    # Medium case with a tiny tile so the pipelined grid + scratch accumulator
    # runs over multiple reduction steps per core.
    lp2, lt2, pr2 = make_inputs(key_b, 3000)
    loss2 = giou_loss(lp2, lt2, pr2, block_rows=8)
    jax.block_until_ready(loss2)
    ref2 = _giou_loss_ref(lp2, lt2, pr2)
    assert jnp.allclose(loss2, ref2, rtol=1e-5, atol=1e-4), (loss2, ref2)

    # SSD-typical prior count with the default (large) tile.
    lp3, lt3, pr3 = make_inputs(key_c, 8732)
    loss3 = giou_loss(lp3, lt3, pr3)
    jax.block_until_ready(loss3)
    ref3 = _giou_loss_ref(lp3, lt3, pr3)
    assert jnp.allclose(loss3, ref3, rtol=2e-5, atol=1e-3), (loss3, ref3)

    print("KERNEL_OK")
</pallas_src>

<mosaic_0001>
module attributes {stable_mosaic.version = 11 : i64} {
  func.func @_giou_loss_kernel(%arg0: i32, %arg1: i32, %arg2: memref<12x8x128xf32, #tpu.memory_space<vmem>>, %arg3: memref<1x1x128xf32, #tpu.memory_space<vmem>>, %arg4: memref<1x128xf32, #tpu.memory_space<vmem>>) attributes {dimension_semantics = [#tpu.dimension_semantics<parallel>, #tpu.dimension_semantics<arbitrary>], iteration_bounds = array<i64: 2, 1>, scalar_prefetch = 0 : i64, scratch_operands = 1 : i64, tpu.core_type = #tpu.core_type<tc>, window_params = [{transform_indices = @transform_0, window_bounds = array<i64: 12, 8, 128>}, {transform_indices = @transform_1, window_bounds = array<i64: 1, 1, 128>}]} {
    %c0_i32 = arith.constant 0 : i32
    %0 = arith.cmpi eq, %arg1, %c0_i32 : i32
    %1 = arith.extui %0 : i1 to i32
    %c0_i32_0 = arith.constant 0 : i32
    %2 = arith.cmpi ne, %1, %c0_i32_0 : i32
    scf.if %2 {
      %cst_45 = arith.constant 0.000000e+00 : f32
      %101 = vector.broadcast %cst_45 : f32 to vector<1x128xf32>
      %c0_46 = arith.constant 0 : index
      %c0_47 = arith.constant 0 : index
      %102 = vector.load %arg4[%c0_46, %c0_47] : memref<1x128xf32, #tpu.memory_space<vmem>>, vector<1x128xf32>
      tpu.vector_store %arg4[%c0_46, %c0_47], %101 {strides = array<i32>} : memref<1x128xf32, #tpu.memory_space<vmem>>, vector<1x128xf32>,
    } else {
    }
    %c0 = arith.constant 0 : index
    %c0_1 = arith.constant 0 : index
    %c0_2 = arith.constant 0 : index
    %3 = vector.load %arg2[%c0, %c0_1, %c0_2] : memref<12x8x128xf32, #tpu.memory_space<vmem>>, vector<1x8x128xf32>
    %4 = vector.shape_cast %3 : vector<1x8x128xf32> to vector<8x128xf32>
    %c8 = arith.constant 8 : index
    %c0_3 = arith.constant 0 : index
    %c0_4 = arith.constant 0 : index
    %5 = vector.load %arg2[%c8, %c0_3, %c0_4] : memref<12x8x128xf32, #tpu.memory_space<vmem>>, vector<1x8x128xf32>
    %6 = vector.shape_cast %5 : vector<1x8x128xf32> to vector<8x128xf32>
    %c10 = arith.constant 10 : index
    %c0_5 = arith.constant 0 : index
    %c0_6 = arith.constant 0 : index
    %7 = vector.load %arg2[%c10, %c0_5, %c0_6] : memref<12x8x128xf32, #tpu.memory_space<vmem>>, vector<1x8x128xf32>
    %8 = vector.shape_cast %7 : vector<1x8x128xf32> to vector<8x128xf32>
    %cst = arith.constant 1.000000e-01 : f32
    %9 = vector.broadcast %cst : f32 to vector<8x128xf32>
    %10 = arith.mulf %4, %9 : vector<8x128xf32>
    %11 = arith.mulf %10, %8 : vector<8x128xf32>
    %12 = arith.addf %6, %11 : vector<8x128xf32>
    %c2 = arith.constant 2 : index
    %c0_7 = arith.constant 0 : index
    %c0_8 = arith.constant 0 : index
    %13 = vector.load %arg2[%c2, %c0_7, %c0_8] : memref<12x8x128xf32, #tpu.memory_space<vmem>>, vector<1x8x128xf32>
    %14 = vector.shape_cast %13 : vector<1x8x128xf32> to vector<8x128xf32>
    %cst_9 = arith.constant 2.000000e-01 : f32
    %15 = vector.broadcast %cst_9 : f32 to vector<8x128xf32>
    %16 = arith.mulf %14, %15 : vector<8x128xf32>
    %17 = math.exp %16 : vector<8x128xf32>
    %18 = arith.mulf %8, %17 : vector<8x128xf32>
    %cst_10 = arith.constant 5.000000e-01 : f32
    %19 = vector.broadcast %cst_10 : f32 to vector<8x128xf32>
    %20 = arith.mulf %19, %18 : vector<8x128xf32>
    %21 = arith.subf %12, %20 : vector<8x128xf32>
    %22 = arith.addf %21, %18 : vector<8x128xf32>
    %c4 = arith.constant 4 : index
    %c0_11 = arith.constant 0 : index
    %c0_12 = arith.constant 0 : index
    %23 = vector.load %arg2[%c4, %c0_11, %c0_12] : memref<12x8x128xf32, #tpu.memory_space<vmem>>, vector<1x8x128xf32>
    %24 = vector.shape_cast %23 : vector<1x8x128xf32> to vector<8x128xf32>
    %c6 = arith.constant 6 : index
    %c0_13 = arith.constant 0 : index
    %c0_14 = arith.constant 0 : index
    %25 = vector.load %arg2[%c6, %c0_13, %c0_14] : memref<12x8x128xf32, #tpu.memory_space<vmem>>, vector<1x8x128xf32>
    %26 = vector.shape_cast %25 : vector<1x8x128xf32> to vector<8x128xf32>
    %27 = arith.subf %26, %24 : vector<8x128xf32>
    %28 = arith.minimumf %22, %26 : vector<8x128xf32>
    %29 = arith.maximumf %21, %24 : vector<8x128xf32>
    %30 = arith.subf %28, %29 : vector<8x128xf32>
    %cst_15 = arith.constant 0.000000e+00 : f32
    %31 = vector.broadcast %cst_15 : f32 to vector<8x128xf32>
    %32 = arith.maximumf %30, %31 : vector<8x128xf32>
    %33 = arith.maximumf %22, %26 : vector<8x128xf32>
    %34 = arith.minimumf %21, %24 : vector<8x128xf32>
    %35 = arith.subf %33, %34 : vector<8x128xf32>
    %cst_16 = arith.constant 0.000000e+00 : f32
    %36 = vector.broadcast %cst_16 : f32 to vector<8x128xf32>
    %37 = arith.maximumf %35, %36 : vector<8x128xf32>
    %c1 = arith.constant 1 : index
    %c0_17 = arith.constant 0 : index
    %c0_18 = arith.constant 0 : index
    %38 = vector.load %arg2[%c1, %c0_17, %c0_18] : memref<12x8x128xf32, #tpu.memory_space<vmem>>, vector<1x8x128xf32>
    %39 = vector.shape_cast %38 : vector<1x8x128xf32> to vector<8x128xf32>
    %c9 = arith.constant 9 : index
    %c0_19 = arith.constant 0 : index
    %c0_20 = arith.constant 0 : index
    %40 = vector.load %arg2[%c9, %c0_19, %c0_20] : memref<12x8x128xf32, #tpu.memory_space<vmem>>, vector<1x8x128xf32>
    %41 = vector.shape_cast %40 : vector<1x8x128xf32> to vector<8x128xf32>
    %c11 = arith.constant 11 : index
    %c0_21 = arith.constant 0 : index
    %c0_22 = arith.constant 0 : index
    %42 = vector.load %arg2[%c11, %c0_21, %c0_22] : memref<12x8x128xf32, #tpu.memory_space<vmem>>, vector<1x8x128xf32>
    %43 = vector.shape_cast %42 : vector<1x8x128xf32> to vector<8x128xf32>
    %cst_23 = arith.constant 1.000000e-01 : f32
    %44 = vector.broadcast %cst_23 : f32 to vector<8x128xf32>
    %45 = arith.mulf %39, %44 : vector<8x128xf32>
    %46 = arith.mulf %45, %43 : vector<8x128xf32>
    %47 = arith.addf %41, %46 : vector<8x128xf32>
    %c3 = arith.constant 3 : index
    %c0_24 = arith.constant 0 : index
    %c0_25 = arith.constant 0 : index
    %48 = vector.load %arg2[%c3, %c0_24, %c0_25] : memref<12x8x128xf32, #tpu.memory_space<vmem>>, vector<1x8x128xf32>
    %49 = vector.shape_cast %48 : vector<1x8x128xf32> to vector<8x128xf32>
    %cst_26 = arith.constant 2.000000e-01 : f32
    %50 = vector.broadcast %cst_26 : f32 to vector<8x128xf32>
    %51 = arith.mulf %49, %50 : vector<8x128xf32>
    %52 = math.exp %51 : vector<8x128xf32>
    %53 = arith.mulf %43, %52 : vector<8x128xf32>
    %cst_27 = arith.constant 5.000000e-01 : f32
    %54 = vector.broadcast %cst_27 : f32 to vector<8x128xf32>
    %55 = arith.mulf %54, %53 : vector<8x128xf32>
    %56 = arith.subf %47, %55 : vector<8x128xf32>
    %57 = arith.addf %56, %53 : vector<8x128xf32>
    %c5 = arith.constant 5 : index
    %c0_28 = arith.constant 0 : index
    %c0_29 = arith.constant 0 : index
    %58 = vector.load %arg2[%c5, %c0_28, %c0_29] : memref<12x8x128xf32, #tpu.memory_space<vmem>>, vector<1x8x128xf32>
    %59 = vector.shape_cast %58 : vector<1x8x128xf32> to vector<8x128xf32>
    %c7 = arith.constant 7 : index
    %c0_30 = arith.constant 0 : index
    %c0_31 = arith.constant 0 : index
    %60 = vector.load %arg2[%c7, %c0_30, %c0_31] : memref<12x8x128xf32, #tpu.memory_space<vmem>>, vector<1x8x128xf32>
    %61 = vector.shape_cast %60 : vector<1x8x128xf32> to vector<8x128xf32>
    %62 = arith.subf %61, %59 : vector<8x128xf32>
    %63 = arith.minimumf %57, %61 : vector<8x128xf32>
    %64 = arith.maximumf %56, %59 : vector<8x128xf32>
    %65 = arith.subf %63, %64 : vector<8x128xf32>
    %cst_32 = arith.constant 0.000000e+00 : f32
    %66 = vector.broadcast %cst_32 : f32 to vector<8x128xf32>
    %67 = arith.maximumf %65, %66 : vector<8x128xf32>
    %68 = arith.maximumf %57, %61 : vector<8x128xf32>
    %69 = arith.minimumf %56, %59 : vector<8x128xf32>
    %70 = arith.subf %68, %69 : vector<8x128xf32>
    %cst_33 = arith.constant 0.000000e+00 : f32
    %71 = vector.broadcast %cst_33 : f32 to vector<8x128xf32>
    %72 = arith.maximumf %70, %71 : vector<8x128xf32>
    %73 = arith.mulf %18, %53 : vector<8x128xf32>
    %74 = arith.mulf %27, %62 : vector<8x128xf32>
    %75 = arith.mulf %32, %67 : vector<8x128xf32>
    %76 = arith.mulf %37, %72 : vector<8x128xf32>
    %77 = arith.addf %73, %74 : vector<8x128xf32>
    %78 = arith.subf %77, %75 : vector<8x128xf32>
    %79 = arith.mulf %75, %76 : vector<8x128xf32>
    %80 = arith.mulf %78, %78 : vector<8x128xf32>
    %81 = arith.addf %79, %80 : vector<8x128xf32>
    %82 = arith.mulf %78, %76 : vector<8x128xf32>
    %83 = tpu.reciprocal %82 : vector<8x128xf32> -> vector<8x128xf32>
    %84 = arith.mulf %81, %83 : vector<8x128xf32>
    %cst_34 = arith.constant 1.000000e+00 : f32
    %85 = vector.broadcast %cst_34 : f32 to vector<8x128xf32>
    %86 = arith.subf %84, %85 : vector<8x128xf32>
    %cst_35 = arith.constant -1.000000e+00 : f32
    %cst_36 = arith.constant 1.000000e+00 : f32
    %87 = vector.broadcast %cst_35 : f32 to vector<8x128xf32>
    %88 = arith.maximumf %87, %86 : vector<8x128xf32>
    %89 = vector.broadcast %cst_36 : f32 to vector<8x128xf32>
    %90 = arith.minimumf %89, %88 : vector<8x128xf32>
    %c0_37 = arith.constant 0 : index
    %c0_38 = arith.constant 0 : index
    %91 = vector.load %arg4[%c0_37, %c0_38] : memref<1x128xf32, #tpu.memory_space<vmem>>, vector<1x128xf32>
    %cst_39 = arith.constant 1.000000e+00 : f32
    %92 = vector.broadcast %cst_39 : f32 to vector<8x128xf32>
    %93 = arith.subf %92, %90 : vector<8x128xf32>
    %cst_40 = arith.constant dense<0.000000e+00> : vector<128xf32>
    %94 = vector.multi_reduction <add>, %93, %cst_40 [0] : vector<8x128xf32> to vector<128xf32>
    %95 = vector.shape_cast %94 : vector<128xf32> to vector<1x128xf32>
    %96 = arith.addf %91, %95 : vector<1x128xf32>
    %c0_41 = arith.constant 0 : index
    %c0_42 = arith.constant 0 : index
    %97 = vector.load %arg4[%c0_41, %c0_42] : memref<1x128xf32, #tpu.memory_space<vmem>>, vector<1x128xf32>
    tpu.vector_store %arg4[%c0_41, %c0_42], %96 {strides = array<i32>} : memref<1x128xf32, #tpu.memory_space<vmem>>, vector<1x128xf32>,
    %c0_i32_43 = arith.constant 0 : i32
    %98 = arith.cmpi eq, %arg1, %c0_i32_43 : i32
    %99 = arith.extui %98 : i1 to i32
    %c0_i32_44 = arith.constant 0 : i32
    %100 = arith.cmpi ne, %99, %c0_i32_44 : i32
    scf.if %100 {
      %c0_45 = arith.constant 0 : index
      %c0_46 = arith.constant 0 : index
      %101 = vector.load %arg4[%c0_45, %c0_46] : memref<1x128xf32, #tpu.memory_space<vmem>>, vector<1x128xf32>
      %cst_47 = arith.constant 5.000000e+00 : f32
      %102 = vector.broadcast %cst_47 : f32 to vector<1x128xf32>
      %103 = arith.mulf %102, %101 : vector<1x128xf32>
      %104 = vector.shape_cast %103 : vector<1x128xf32> to vector<1x1x128xf32>
      %c0_48 = arith.constant 0 : index
      %c0_49 = arith.constant 0 : index
      %c0_50 = arith.constant 0 : index
      %105 = vector.load %arg3[%c0_48, %c0_49, %c0_50] : memref<1x1x128xf32, #tpu.memory_space<vmem>>, vector<1x1x128xf32>
      tpu.vector_store %arg3[%c0_48, %c0_49, %c0_50], %104 {strides = array<i32>} : memref<1x1x128xf32, #tpu.memory_space<vmem>>, vector<1x1x128xf32>,
    } else {
    }
    return
  }
  func.func @transform_0(%arg0: i32, %arg1: i32) -> (i32, i32, i32) {
    %c1_i32 = arith.constant 1 : i32
    %0 = arith.muli %arg0, %c1_i32 : i32
    %1 = arith.addi %0, %arg1 : i32
    %c0_i32 = arith.constant 0 : i32
    %c0_i32_0 = arith.constant 0 : i32
    %c0_i32_1 = arith.constant 0 : i32
    return %c0_i32, %1, %c0_i32_0 : i32, i32, i32
  }
  func.func @transform_1(%arg0: i32, %arg1: i32) -> (i32, i32, i32) {
    %c0_i32 = arith.constant 0 : i32
    %c0_i32_0 = arith.constant 0 : i32
    %c0_i32_1 = arith.constant 0 : i32
    return %arg0, %c0_i32, %c0_i32_0 : i32, i32, i32
  }
}

</mosaic_0001>

<llo_original>
// kernel: tpu_custom_call.1
$region0: #{tpu_custom_call.1}
  #allocation0 [shape = 'u32[]', space=smem, size = 0x4, offset = 0x4, fixed_abs, tag = 'smem constant byte address 0x4 - core index']
  #allocation1 [shape = 'u32[144,128]{1,0:T(1,128)}', space=vmem, size = 0x12000, scoped, tag = 'internal scratch']
  #allocation2 [shape = 'f32[1,128]{1,0:T(1,128)}', space=vmem, size = 0x200, scoped, tag = 'scratch operand']
  %s0 = inlined_call_operand.hbm [shape: f32[12,16,128], index: 0, kind: input, shape index: {}]
  %s1 = inlined_call_operand.hbm [shape: f32[2,1,128], index: 1, kind: output, shape index: {}]
  %s2 = sld [smem:[#allocation0]]
  $region49: #{tpu_custom_call.1} parent=0
    _
  %s4 = ssub.s32 1, %s2
  %s5 = scalar_select 0, %s4, %s2
  $region1: #{tpu_custom_call.1} parent=0
    #allocation3 [shape = 'u8[98304]{0}', space=vmem, size = 0x18000, scoped, tag = 'input window, operand 0']
    #allocation4 [shape = 's32[2]{0}', space=sflag, size = 0x8, scoped, tag = 'scoped memory for tpu_custom_call.1']
    #allocation5 [shape = 's32[2]{0}', space=sflag, size = 0x8, scoped, tag = 'scoped memory for tpu_custom_call.1']
    #allocation6 [shape = 'u8[1024]{0}', space=vmem, size = 0x400, scoped, tag = 'output window, operand 0']
    %6 = vsyncpa [#allocation4], 0
    %s7 = scalar_lea.sflag [#allocation4], 1
    %8 = vsyncpa %s7, 0
    %9 = vsyncpa [#allocation5], 0
    %s10 = scalar_lea.sflag [#allocation5], 1
    %11 = vsyncpa %s10, 0
    loop: start=0, step=1, limit=4
    $region2: #{tpu_custom_call.1} parent=1 // loop_pre_header
      _
    $region3: #{tpu_custom_call.1} parent=1 // loop_header
      %s13 = sphi 0, %s17
      %p14 = scmp.ge.s32.totalorder %s13, 4
      %s20 = sphi 0, %s32
      %s21 = sphi 0, %s28
      %s22 = sphi 0, %s20
      %s23 = sphi 0, %s21
      %s24 = sphi 0, %s22
      %s25 = sphi 0, %s23
      %s37 = sphi 0, %s39
      %s40 = sphi 0, %s37
      %s41 = sphi 0, %s40
      %s57 = sphi 0, %s41
      %s63 = sphi 0, %s65
      %s66 = sphi 0, %s63
      %s67 = sphi 0, %s66
      %s83 = sphi 0, %s67
    $region4: #{tpu_custom_call.1} parent=1 // loop_header_branch
      %16 = sbr.rel (%p14) target = $region8
    $region5: #{tpu_custom_call.1} parent=1 // loop_body
      %s18 = ssub.s32 %s13, 1
      %s19 = ssub.s32 %s13, 2
      %s26 = sadd.s32 1, %s21
      %p27 = scmp.ge.s32.totalorder %s26, 1
      %s28 = scalar_select %p27, 0, %s26
      %s29 = sadd.s32 1, %s20
      %s30 = scalar_select %p27, %s29, %s20
      %p31 = scmp.ge.s32.totalorder %s30, 2
      %s32 = scalar_select %p31, 0, %s30
      %s33 = sadd.s32 %s20, %s21
      %s34 = sadd.s32 %s32, %s28
      %s35 = ssub.s32 %s33, %s34
      %p36 = scmp.eq.s32.totalorder %s35, 0
      %s38 = sadd.s32 %s37, 1
      %s39 = scalar_select %p36, %s37, %s38
      %p42 = pneg %p36
      %p43 = scmp.eq.s32.totalorder %s13, 1
      %p44 = por %p42, %p43
      %p45 = scmp.ne.s32.totalorder %s37, %s40
      %p46 = scmp.eq.s32.totalorder %s13, 0
      %p47 = por %p45, %p46
      %p48 = scmp.ne.s32.totalorder %s37, %s40
      %p49 = scmp.eq.s32.totalorder %s18, 1
      %p50 = por %p48, %p49
      %p51 = scmp.ne.s32.totalorder %s40, %s41
      %p52 = scmp.eq.s32.totalorder %s18, 0
      %p53 = por %p51, %p52
      %p54 = scmp.ne.s32.totalorder %s40, %s41
      %p55 = scmp.eq.s32.totalorder %s19, 1
      %p56 = por %p54, %p55
      %p58 = scmp.ne.s32.totalorder %s41, %s57
      %p59 = scmp.eq.s32.totalorder %s19, 0
      %p60 = por %p58, %p59
      %s61 = ssub.s32 %s20, %s32
      %p62 = scmp.eq.s32.totalorder %s61, 0
      %s64 = sadd.s32 %s63, 1
      %s65 = scalar_select %p62, %s63, %s64
      %p68 = pneg %p62
      %p69 = scmp.eq.s32.totalorder %s13, 1
      %p70 = por %p68, %p69
      %p71 = scmp.ne.s32.totalorder %s63, %s66
      %p72 = scmp.eq.s32.totalorder %s13, 0
      %p73 = por %p71, %p72
      %p74 = scmp.ne.s32.totalorder %s63, %s66
      %p75 = scmp.eq.s32.totalorder %s18, 1
      %p76 = por %p74, %p75
      %p77 = scmp.ne.s32.totalorder %s66, %s67
      %p78 = scmp.eq.s32.totalorder %s18, 0
      %p79 = por %p77, %p78
      %p80 = scmp.ne.s32.totalorder %s66, %s67
      %p81 = scmp.eq.s32.totalorder %s19, 1
      %p82 = por %p80, %p81
      %p84 = scmp.ne.s32.totalorder %s67, %s83
      %p85 = scmp.eq.s32.totalorder %s19, 0
      %p86 = por %p84, %p85
      %p87 = scmp.le.s32.totalorder 1, %s13
      %p88 = scmp.lt.s32.totalorder %s13, 3
      %p89 = pnand %p87, %p88
      %p90 = pneg %p89
      // Predicated region
      $region9: #{tpu_custom_call.1} parent=5 // pred_check
        _
      $region10: #{tpu_custom_call.1} parent=5 // pred_check_branch
        %92 = sbr.rel (%p89) target = $region12
      $region11: #{tpu_custom_call.1} parent=5 // pred_region
        %s93 = ssub.s32 %s13, 1
      $region12: #{tpu_custom_call.1} parent=5 // pred_fallthru
        _
      %p94 = scmp.lt.s32.totalorder %s13, 2
      // Predicated region
      $region13: #{tpu_custom_call.1} parent=5 // pred_check
        %p95 = pneg %p94
      $region14: #{tpu_custom_call.1} parent=5 // pred_check_branch
        %97 = sbr.rel (%p95) target = $region16
      $region15: #{tpu_custom_call.1} parent=5 // pred_region
        // Predicated region
        $region17: #{tpu_custom_call.1} parent=15 // pred_check
          %p98 = pneg %p47
        $region18: #{tpu_custom_call.1} parent=15 // pred_check_branch
          %100 = sbr.rel (%p98) target = $region20
        $region19: #{tpu_custom_call.1} parent=15 // pred_region
          %s101 = sand.u32 %s37, 1
          %s102 = scalar_lea.sflag [#allocation4], %s101
          %s103 = sand.u32 %s37, 1
          %s104 = smul.addr %s103, 96
          %s105 = scalar_lea.vmem [#allocation3], %s104
          %s106 = sadd.s32 %s20, %s21
          %s108 = ssub.s32 1536, 1536
          %109 = vsyncadd %s102, %s108
          %s110 = smul.addr %s106, 128
          %s111 = scalar_lea.hbm %s0, %s110
          %s112 = sshll.u32 %s105, 4
          %s113 = int_to_ptr.vmem [resolvable:$true] %s112
          %118 = dma.hbm_to_vmem [thread:$0]  %s111, 1536, %s113, %s102, 256, 128, 8
        $region20: #{tpu_custom_call.1} parent=15 // pred_fallthru
          _
      $region16: #{tpu_custom_call.1} parent=5 // pred_fallthru
        _
      %p119 = scmp.le.s32.totalorder 1, %s13
      %p120 = scmp.lt.s32.totalorder %s13, 3
      %p121 = pnand %p119, %p120
      %p122 = pneg %p121
      // Predicated region
      $region21: #{tpu_custom_call.1} parent=5 // pred_check
        _
      $region22: #{tpu_custom_call.1} parent=5 // pred_check_branch
        %124 = sbr.rel (%p121) target = $region24
      $region23: #{tpu_custom_call.1} parent=5 // pred_region
        %s125 = ssub.s32 %s13, 1
        %s126 = sand.u32 %s40, 1
        %s127 = scalar_lea.sflag [#allocation4], %s126
        %s128 = sand.u32 %s40, 1
        %s129 = smul.addr %s128, 96
        %s130 = scalar_lea.vmem [#allocation3], %s129
        // Predicated region
        $region25: #{tpu_custom_call.1} parent=23 // pred_check
          %p131 = pneg %p53
        $region26: #{tpu_custom_call.1} parent=23 // pred_check_branch
          %133 = sbr.rel (%p131) target = $region28
        $region27: #{tpu_custom_call.1} parent=23 // pred_region
          %134 = dma.done %s127, 1536
        $region28: #{tpu_custom_call.1} parent=23 // pred_fallthru
          _
        %s135 = sand.u32 %s40, 1
        %s136 = scalar_lea.sflag [#allocation4], %s135
        %s137 = sand.u32 %s40, 1
        %s138 = smul.addr %s137, 96
        %s139 = scalar_lea.vmem [#allocation3], %s138
        %p140 = pneg %p53
        %p141 = pneg %p50
        %p142 = pneg %p79
        %p143 = pneg %p76
        %s144 = sand.u32 %s66, 1
        %s145 = scalar_lea.sflag [#allocation5], %s144
        %s146 = sand.u32 %s66, 1
        %s147 = scalar_lea.vmem [#allocation6], %s146
        %s148 = sadd.s32 %s22, %s23
        %p149 = scmp.eq.s32.totalorder %s23, 0
        // Predicated region
        $region29: #{tpu_custom_call.1} parent=23 // pred_check
          %p150 = pneg %p149
        $region30: #{tpu_custom_call.1} parent=23 // pred_check_branch
          %152 = sbr.rel (%p150) target = $region32
        $region31: #{tpu_custom_call.1} parent=23 // pred_region
          %153 = vst [vmem:[#allocation2] sm:$0x1] 0.0
        $region32: #{tpu_custom_call.1} parent=23 // pred_fallthru
          _
        %v154 = vld [vmem:[%s130] sm:$0xff]
        %s155 = scalar_lea.vmem %s130, 64 [#allocation3]
        %v156 = vld [vmem:[%s155] sm:$0xff]
        %s157 = scalar_lea.vmem %s130, 80 [#allocation3]
        %v158 = vld [vmem:[%s157] sm:$0xff]
        %v159 = vmul.f32 %v154, 0.1
        %v160 = vmul.f32 %v159, %v158
        %v161 = vadd.f32 %v156, %v160
        %s162 = scalar_lea.vmem %s130, 16 [#allocation3]
        %v163 = vld [vmem:[%s162] sm:$0xff]
        %v164 = vmul.f32 %v163, 0.2
        %v165 = vmul.f32 %v164, 1.442695
        %v166 = vpow.pop %v165
        %v167 = vmul.f32 %v158, %v166
        %v168 = vmul.f32 %v167, 0.5
        %v169 = vsub.f32 %v161, %v168
        %v170 = vadd.f32 %v169, %v167
        %s171 = scalar_lea.vmem %s130, 32 [#allocation3]
        %v172 = vld [vmem:[%s171] sm:$0xff]
        %s173 = scalar_lea.vmem %s130, 48 [#allocation3]
        %v174 = vld [vmem:[%s173] sm:$0xff]
        %v175 = vsub.f32 %v174, %v172
        %v176 = vmin.f32 %v170, %v174
        %v177 = vmax.f32 %v169, %v172
        %v178 = vsub.f32 %v176, %v177
        %v179 = vmax.f32 %v178, 0.0
        %v180 = vmax.f32 %v170, %v174
        %v181 = vmin.f32 %v169, %v172
        %v182 = vsub.f32 %v180, %v181
        %v183 = vmax.f32 %v182, 0.0
        %s184 = scalar_lea.vmem %s130, 8 [#allocation3]
        %v185 = vld [vmem:[%s184] sm:$0xff]
        %s186 = scalar_lea.vmem %s130, 72 [#allocation3]
        %v187 = vld [vmem:[%s186] sm:$0xff]
        %s188 = scalar_lea.vmem %s130, 88 [#allocation3]
        %v189 = vld [vmem:[%s188] sm:$0xff]
        %v190 = vmul.f32 %v185, 0.1
        %v191 = vmul.f32 %v190, %v189
        %v192 = vadd.f32 %v187, %v191
        %s193 = scalar_lea.vmem %s130, 24 [#allocation3]
        %v194 = vld [vmem:[%s193] sm:$0xff]
        %v195 = vmul.f32 %v194, 0.2
        %v196 = vmul.f32 %v195, 1.442695
        %v197 = vpow.pop %v196
        %v198 = vmul.f32 %v189, %v197
        %v199 = vmul.f32 %v198, 0.5
        %v200 = vsub.f32 %v192, %v199
        %v201 = vadd.f32 %v200, %v198
        %s202 = scalar_lea.vmem %s130, 40 [#allocation3]
        %v203 = vld [vmem:[%s202] sm:$0xff]
        %s204 = scalar_lea.vmem %s130, 56 [#allocation3]
        %v205 = vld [vmem:[%s204] sm:$0xff]
        %v206 = vsub.f32 %v205, %v203
        %v207 = vmin.f32 %v201, %v205
        %v208 = vmax.f32 %v200, %v203
        %v209 = vsub.f32 %v207, %v208
        %v210 = vmax.f32 %v209, 0.0
        %v211 = vmax.f32 %v201, %v205
        %v212 = vmin.f32 %v200, %v203
        %v213 = vsub.f32 %v211, %v212
        %v214 = vmax.f32 %v213, 0.0
        %v215 = vmul.f32 %v167, %v198
        %v216 = vmul.f32 %v175, %v206
        %v217 = vmul.f32 %v179, %v210
        %v218 = vmul.f32 %v183, %v214
        %v219 = vadd.f32 %v215, %v216
        %v220 = vsub.f32 %v219, %v217
        %v221 = vmul.f32 %v217, %v218
        %v222 = vmul.f32 %v220, %v220
        %v223 = vadd.f32 %v221, %v222
        %v224 = vmul.f32 %v220, %v218
        %v225 = vrcp.pop %v224
        %v226 = vmul.f32 %v223, %v225
        %v227 = vsub.f32 %v226, 1.0
        %v228 = vmax.f32 %v227, -1.0
        %v229 = vmin.f32 %v228, 1.0
        %v230 = vld [vmem:[#allocation2] sm:$0x1]
        %v231 = vsub.f32 1.0, %v229
        %v232 = vrot.slane %v231, 4
        %v233 = vadd.f32 %v231, %v232
        %v234 = vrot.slane %v233, 2
        %v235 = vadd.f32 %v233, %v234
        %v236 = vrot.slane %v235, 1
        %v237 = vadd.f32 %v235, %v236
        %v238 = vadd.f32 %v230, %v237
        %239 = vst [vmem:[#allocation2] sm:$0x1] %v238
        // Predicated region
        $region33: #{tpu_custom_call.1} parent=23 // pred_check
          %p240 = pneg %p149
        $region34: #{tpu_custom_call.1} parent=23 // pred_check_branch
          %242 = sbr.rel (%p240) target = $region36
        $region35: #{tpu_custom_call.1} parent=23 // pred_region
          %v243 = vld [vmem:[#allocation2] sm:$0x1]
          %v244 = vmul.f32 %v243, 5.0
          %245 = vst [vmem:[%s147] sm:$0x1] %v244
        $region36: #{tpu_custom_call.1} parent=23 // pred_fallthru
          _
        %s246 = sand.u32 %s66, 1
        %s247 = scalar_lea.sflag [#allocation5], %s246
        %s248 = sand.u32 %s66, 1
        %s249 = scalar_lea.vmem [#allocation6], %s248
        // Predicated region
        $region37: #{tpu_custom_call.1} parent=23 // pred_check
          %p250 = pneg %p76
        $region38: #{tpu_custom_call.1} parent=23 // pred_check_branch
          %252 = sbr.rel (%p250) target = $region40
        $region39: #{tpu_custom_call.1} parent=23 // pred_region
          %s254 = ssub.s32 16, 16
          %255 = vsyncadd %s247, %s254
          %s256 = smul.addr %s22, 16
          %s257 = scalar_lea.hbm %s1, %s256
          %s259 = sshll.u32 %s249, 4
          %s260 = int_to_ptr.vmem [resolvable:$true] %s259
          %262 = dma.vmem_to_hbm [thread:$0]  %s260, 16, %s257, %s247
        $region40: #{tpu_custom_call.1} parent=23 // pred_fallthru
          _
      $region24: #{tpu_custom_call.1} parent=5 // pred_fallthru
        _
      %p263 = scmp.le.s32.totalorder 2, %s13
      // Predicated region
      $region41: #{tpu_custom_call.1} parent=5 // pred_check
        %p264 = pneg %p263
      $region42: #{tpu_custom_call.1} parent=5 // pred_check_branch
        %266 = sbr.rel (%p264) target = $region44
      $region43: #{tpu_custom_call.1} parent=5 // pred_region
        %s267 = ssub.s32 %s13, 2
        // Predicated region
        $region45: #{tpu_custom_call.1} parent=43 // pred_check
          %p268 = pneg %p82
        $region46: #{tpu_custom_call.1} parent=43 // pred_check_branch
          %270 = sbr.rel (%p268) target = $region48
        $region47: #{tpu_custom_call.1} parent=43 // pred_region
          %s271 = sand.u32 %s67, 1
          %s272 = scalar_lea.sflag [#allocation5], %s271
          %s273 = sand.u32 %s67, 1
          %s274 = scalar_lea.vmem [#allocation6], %s273
          %275 = dma.done %s272, 16
        $region48: #{tpu_custom_call.1} parent=43 // pred_fallthru
          _
      $region44: #{tpu_custom_call.1} parent=5 // pred_fallthru
        _
    $region6: #{tpu_custom_call.1} parent=1 // loop_footer
      %s17 = sadd.s32 1, %s13
    $region7: #{tpu_custom_call.1} parent=1 // loop_footer_branch
      %12 = sbr.rel target = $region3
    $region8: #{tpu_custom_call.1} parent=1 // loop_exit
      _
    %276 = vsyncpa [#allocation4], 1
    %s277 = scalar_lea.sflag [#allocation4], 1
    %278 = vsyncpa %s277, 1
    %279 = vsyncpa [#allocation5], 1
    %s280 = scalar_lea.sflag [#allocation5], 1
    %281 = vsyncpa %s280, 1

</llo_original>
